<compile_context>
chip_gen: v6e
topology: v6e:2x2x1
jax: 0.10.0
libtpu: 0.0.40
codegen_flags: <defaults>
</compile_context>

<pallas_src>
import functools

import jax
import jax.numpy as jnp
from jax import lax
from jax.experimental import pallas as pl
from jax.experimental.pallas import tpu as pltpu

LANES = 128
SUBLANES = 8
MAX_COLS = 1024                      # cap on the lane width of the 2D slab
MAX_BLOCK_BYTES = 2 * 1024 * 1024    # per-input HBM bytes per grid block


def _masked_sq_partial_kernel(out_ref, tgt_ref, psum_ref, *, ignore_value,
                              block_rows, cols, rows_valid_last, mask_last):
    """One grid step: (8, cols) partial sum of (o - t)^2 * [t < ignore_value]."""

    def fold(sq):
        # (block_rows, cols) -> (8, cols). The reshape keeps (8, 128) vreg
        # tiles intact, so the reduction is plain vreg-wise VPU adds.
        if block_rows > SUBLANES:
            sq = sq.reshape(block_rows // SUBLANES, SUBLANES, cols).sum(axis=0)
        return sq

    o = out_ref[...].astype(jnp.float32)
    t = tgt_ref[...].astype(jnp.float32)
    d = o - t
    sel = t < ignore_value          # only depths below the ignore value count

    if not mask_last:
        # rows % block_rows == 0: every block is full, no bounds mask anywhere.
        psum_ref[0] = fold(jnp.where(sel, d * d, 0.0))
    else:
        i = pl.program_id(0)
        last = pl.num_programs(0) - 1

        @pl.when(i < last)
        def _():
            # Full interior block: cmp/sub/mul/select/add only.
            psum_ref[0] = fold(jnp.where(sel, d * d, 0.0))

        @pl.when(i == last)
        def _():
            # Partial final block: additionally mask rows past the true extent
            # (that region of the VMEM buffer holds stale data; jnp.where is a
            # select, so garbage/NaN there never propagates).
            row_ids = lax.broadcasted_iota(jnp.int32, d.shape, 0)
            m = sel & (row_ids < rows_valid_last)
            psum_ref[0] = fold(jnp.where(m, d * d, 0.0))


def _choose_lane_cols(shape, n_elems):
    """Lane width of the 2D slab fed to the kernel.

    Prefer the largest trailing-dims product that is already a multiple of 128
    (layout friendly), capped so blocks stay VMEM-sized and the slab has >= 8
    rows. Fall back to 128 (flat view + JAX tail), or None for tiny inputs.
    """
    best = None
    prod = 1
    for dim in reversed(shape):
        prod *= int(dim)
        if prod % LANES == 0 and prod <= MAX_COLS and n_elems // prod >= SUBLANES:
            best = prod
    if best is not None:
        return best
    if n_elems >= SUBLANES * LANES:
        return LANES
    return None


def limited_depth_mse_loss(outputs, targets, ignore_value):
    """Pallas implementation of LimitedDepthMSELoss.forward (reduction='mean')."""
    assert outputs.shape == targets.shape
    ignore_value = float(ignore_value)   # static config scalar (multiDepthIgnoreValue)
    n_elems = int(outputs.size)

    cols = _choose_lane_cols(outputs.shape, n_elems)
    if cols is None:
        # TODO(synk): inputs smaller than 8x128 elements are not worth a kernel
        # launch; compute directly in JAX with identical semantics.
        o = outputs.reshape(-1).astype(jnp.float32)
        t = targets.reshape(-1).astype(jnp.float32)
        d = o - t
        return jnp.sum(jnp.where(t < ignore_value, d * d, 0.0)) / jnp.float32(n_elems)

    rows = n_elems // cols
    main = rows * cols

    # Ragged tail (< cols elements): reduced in plain JAX on a tiny slice
    # instead of padding full copies of both inputs through HBM.
    tail_sum = jnp.float32(0.0)
    if main != n_elems:
        o_t = outputs.reshape(-1)[main:].astype(jnp.float32)
        t_t = targets.reshape(-1)[main:].astype(jnp.float32)
        d_t = o_t - t_t
        tail_sum = jnp.sum(jnp.where(t_t < ignore_value, d_t * d_t, 0.0))
        o2d = outputs.reshape(-1)[:main].reshape(rows, cols)
        t2d = targets.reshape(-1)[:main].reshape(rows, cols)
    else:
        o2d = outputs.reshape(rows, cols)
        t2d = targets.reshape(rows, cols)

    itemsize = jnp.dtype(outputs.dtype).itemsize
    block_elems = MAX_BLOCK_BYTES // itemsize            # 512K f32 / 1M bf16
    cap_rows = max(SUBLANES, (block_elems // cols) // SUBLANES * SUBLANES)
    # Split into >= 2 grid blocks whenever possible so both v7x TensorCores get
    # work under dimension_semantics=("parallel",).
    half_rows = max(SUBLANES, pl.cdiv(pl.cdiv(rows, 2), SUBLANES) * SUBLANES)
    block_rows = min(cap_rows, half_rows)
    nb = pl.cdiv(rows, block_rows)
    rows_valid_last = rows - (nb - 1) * block_rows
    mask_last = rows_valid_last != block_rows

    kernel = functools.partial(
        _masked_sq_partial_kernel,
        ignore_value=ignore_value,
        block_rows=block_rows,
        cols=cols,
        rows_valid_last=rows_valid_last,
        mask_last=mask_last,
    )

    cost = pl.CostEstimate(
        flops=5 * main,                      # sub, mul, cmp, select, add
        transcendentals=0,
        bytes_accessed=2 * main * itemsize + nb * SUBLANES * cols * 4,
    )

    partials = pl.pallas_call(
        kernel,
        out_shape=jax.ShapeDtypeStruct((nb, SUBLANES, cols), jnp.float32),
        grid_spec=pltpu.PrefetchScalarGridSpec(
            num_scalar_prefetch=0,
            grid=(nb,),
            in_specs=[
                pl.BlockSpec((block_rows, cols), lambda i: (i, 0)),
                pl.BlockSpec((block_rows, cols), lambda i: (i, 0)),
            ],
            out_specs=pl.BlockSpec((1, SUBLANES, cols), lambda i: (i, 0, 0)),
        ),
        compiler_params=pltpu.CompilerParams(
            dimension_semantics=("parallel",),   # independent partial-sum blocks
            vmem_limit_bytes=32 * 1024 * 1024,   # safe on v5e/v6e/v7x
        ),
        cost_estimate=cost,
    )(o2d, t2d)

    # Tiny final reduce + tail + mean normalization outside the kernel.
    return (jnp.sum(partials) + tail_sum) / jnp.float32(n_elems)


def reference_loss(outputs, targets, ignore_value):
    o = outputs.astype(jnp.float32)
    t = targets.astype(jnp.float32)
    seltargets = jnp.where(t < ignore_value, t, o)
    return jnp.mean((o - seltargets) ** 2)


if __name__ == "__main__":
    # Deterministic "config": config.multiDepthIgnoreValue[net_idx]
    ignore_value = 0.5

    key = jax.random.PRNGKey(0)

    def check(shape, dtype, case_idx):
        k1, k2 = jax.random.split(jax.random.fold_in(key, case_idx))
        outputs = jax.random.normal(k1, shape, dtype=jnp.float32).astype(dtype)
        targets = jax.random.uniform(k2, shape, dtype=jnp.float32).astype(dtype)
        loss = jax.block_until_ready(
            limited_depth_mse_loss(outputs, targets, ignore_value))
        ref = reference_loss(outputs, targets, ignore_value)
        assert jnp.allclose(loss, ref, rtol=1e-4, atol=1e-6), (shape, dtype, loss, ref)

    # Main NCHW case: H*W = 256 is lane-dense -> trailing-product path,
    # single full block, no mask, no tail.
    check((2, 4, 16, 16), jnp.float32, 0)
    # Ragged case: JAX tail + pl.when-gated last-block mask + 2-step grid.
    check((2, 3, 17, 19), jnp.float32, 1)
    # bf16 passthrough + multi-sublane fold (block_rows > 8).
    check((2, 4, 64, 64), jnp.bfloat16, 2)

    print("KERNEL_OK")
</pallas_src>

<mosaic_0001>
module attributes {stable_mosaic.version = 11 : i64} {
  func.func @_masked_sq_partial_kernel(%arg0: i32, %arg1: memref<8x256xf32, #tpu.memory_space<vmem>>, %arg2: memref<8x256xf32, #tpu.memory_space<vmem>>, %arg3: memref<1x8x256xf32, #tpu.memory_space<vmem>>) attributes {dimension_semantics = [#tpu.dimension_semantics<parallel>], iteration_bounds = array<i64: 1>, scalar_prefetch = 0 : i64, scratch_operands = 0 : i64, tpu.core_type = #tpu.core_type<tc>, window_params = [{transform_indices = @transform_0, window_bounds = array<i64: 8, 256>}, {transform_indices = @transform_1, window_bounds = array<i64: 8, 256>}, {transform_indices = @transform_2, window_bounds = array<i64: 1, 8, 256>}]} {
    %c0 = arith.constant 0 : index
    %c0_0 = arith.constant 0 : index
    %0 = vector.load %arg1[%c0, %c0_0] : memref<8x256xf32, #tpu.memory_space<vmem>>, vector<8x256xf32>
    %c0_1 = arith.constant 0 : index
    %c0_2 = arith.constant 0 : index
    %1 = vector.load %arg2[%c0_1, %c0_2] : memref<8x256xf32, #tpu.memory_space<vmem>>, vector<8x256xf32>
    %2 = arith.subf %0, %1 : vector<8x256xf32>
    %cst = arith.constant 5.000000e-01 : f32
    %3 = vector.broadcast %cst : f32 to vector<8x256xf32>
    %4 = arith.cmpf olt, %1, %3 : vector<8x256xf32>
    %5 = arith.mulf %2, %2 : vector<8x256xf32>
    %cst_3 = arith.constant 0.000000e+00 : f32
    %6 = vector.broadcast %cst_3 : f32 to vector<8x256xf32>
    %7 = arith.select %4, %5, %6 : vector<8x256xi1>, vector<8x256xf32>
    %c0_4 = arith.constant 0 : index
    %c0_5 = arith.constant 0 : index
    %c0_6 = arith.constant 0 : index
    %8 = vector.load %arg3[%c0_4, %c0_5, %c0_6] : memref<1x8x256xf32, #tpu.memory_space<vmem>>, vector<1x8x256xf32>
    %9 = vector.shape_cast %8 : vector<1x8x256xf32> to vector<8x256xf32>
    %10 = vector.shape_cast %7 : vector<8x256xf32> to vector<1x8x256xf32>
    tpu.vector_store %arg3[%c0_4, %c0_5, %c0_6], %10 {strides = array<i32>} : memref<1x8x256xf32, #tpu.memory_space<vmem>>, vector<1x8x256xf32>,
    return
  }
  func.func @transform_0(%arg0: i32) -> (i32, i32) {
    %c0_i32 = arith.constant 0 : i32
    %c0_i32_0 = arith.constant 0 : i32
    return %arg0, %c0_i32 : i32, i32
  }
  func.func @transform_1(%arg0: i32) -> (i32, i32) {
    %c0_i32 = arith.constant 0 : i32
    %c0_i32_0 = arith.constant 0 : i32
    return %arg0, %c0_i32 : i32, i32
  }
  func.func @transform_2(%arg0: i32) -> (i32, i32, i32) {
    %c0_i32 = arith.constant 0 : i32
    %c0_i32_0 = arith.constant 0 : i32
    %c0_i32_1 = arith.constant 0 : i32
    return %arg0, %c0_i32, %c0_i32_0 : i32, i32, i32
  }
}

</mosaic_0001>

<llo_original>
// kernel: tpu_custom_call.1
$region0: #{tpu_custom_call.1}
  #allocation0 [shape = 'u32[]', space=smem, size = 0x4, offset = 0x4, fixed_abs, tag = 'smem constant byte address 0x4 - core index']
  #allocation1 [shape = 'u32[144,128]{1,0:T(1,128)}', space=vmem, size = 0x12000, scoped, tag = 'internal scratch']
  %s0 = inlined_call_operand.hbm [shape: f32[8,256], index: 0, kind: input, shape index: {}]
  %s1 = inlined_call_operand.hbm [shape: f32[8,256], index: 1, kind: input, shape index: {}]
  %s2 = inlined_call_operand.hbm [shape: f32[1,8,256], index: 2, kind: output, shape index: {}]
  %s3 = sld [smem:[#allocation0]]
  $region26: #{tpu_custom_call.1} parent=0
    _
  %s5 = ssub.s32 1, %s3
  %s6 = scalar_select 0, %s5, %s3
  $region1: #{tpu_custom_call.1} parent=0
    #allocation2 [shape = 'u8[8192]{0}', space=vmem, size = 0x2000, scoped, tag = 'input window, operand 0, single buffered']
    #allocation3 [shape = 's32[1]{0}', space=sflag, size = 0x4, scoped, tag = 'scoped memory for tpu_custom_call.1']
    #allocation4 [shape = 's32[1]{0}', space=sflag, size = 0x4, scoped, tag = 'scoped memory for tpu_custom_call.1']
    #allocation5 [shape = 'u8[8192]{0}', space=vmem, size = 0x2000, scoped, tag = 'input window, operand 1, single buffered']
    #allocation6 [shape = 's32[1]{0}', space=sflag, size = 0x4, scoped, tag = 'scoped memory for tpu_custom_call.1']
    #allocation7 [shape = 'u8[8192]{0}', space=vmem, size = 0x2000, scoped, tag = 'output window, operand 0, single buffered']
    %7 = vsyncpa [#allocation3], 0
    %8 = vsyncpa [#allocation6], 0
    %9 = vsyncpa [#allocation4], 0
    // Predicated region
    $region2: #{tpu_custom_call.1} parent=1 // pred_check
      _
    $region3: #{tpu_custom_call.1} parent=1 // pred_check_branch
      %11 = sbr.rel (0) target = $region5
    $region4: #{tpu_custom_call.1} parent=1 // pred_region
      %s13 = ssub.s32 256, 256
      %14 = vsyncadd [#allocation3], %s13
      %s16 = sshll.u32 [#allocation2], 4
      %s17 = int_to_ptr.vmem [resolvable:$true] %s16
      %19 = dma.hbm_to_vmem [thread:$0]  %s0, 256, %s17, [#allocation3]
    $region5: #{tpu_custom_call.1} parent=1 // pred_fallthru
      _
    // Predicated region
    $region6: #{tpu_custom_call.1} parent=1 // pred_check
      _
    $region7: #{tpu_custom_call.1} parent=1 // pred_check_branch
      %21 = sbr.rel (0) target = $region9
    $region8: #{tpu_custom_call.1} parent=1 // pred_region
      %s23 = ssub.s32 256, 256
      %24 = vsyncadd [#allocation6], %s23
      %s26 = sshll.u32 [#allocation5], 4
      %s27 = int_to_ptr.vmem [resolvable:$true] %s26
      %29 = dma.hbm_to_vmem [thread:$0]  %s1, 256, %s27, [#allocation6]
    $region9: #{tpu_custom_call.1} parent=1 // pred_fallthru
      _
    // Predicated region
    $region10: #{tpu_custom_call.1} parent=1 // pred_check
      _
    $region11: #{tpu_custom_call.1} parent=1 // pred_check_branch
      %31 = sbr.rel (0) target = $region13
    $region12: #{tpu_custom_call.1} parent=1 // pred_region
      %32 = dma.done [#allocation3], 256
    $region13: #{tpu_custom_call.1} parent=1 // pred_fallthru
      _
    // Predicated region
    $region14: #{tpu_custom_call.1} parent=1 // pred_check
      _
    $region15: #{tpu_custom_call.1} parent=1 // pred_check_branch
      %34 = sbr.rel (0) target = $region17
    $region16: #{tpu_custom_call.1} parent=1 // pred_region
      %35 = dma.done [#allocation6], 256
    $region17: #{tpu_custom_call.1} parent=1 // pred_fallthru
      _
    %v36 = vld [vmem:[#allocation2] sm:$0xff]
    %v37 = vld [vmem:[#allocation2 + $0x8] sm:$0xff]
    %v38 = vld [vmem:[#allocation5] sm:$0xff]
    %v39 = vld [vmem:[#allocation5 + $0x8] sm:$0xff]
    %v40 = vsub.f32 %v36, %v38
    %v41 = vsub.f32 %v37, %v39
    %vm42 = vcmp.lt.f32.partialorder %v38, 0.5
    %vm43 = vcmp.lt.f32.partialorder %v39, 0.5
    %v44 = vmul.f32 %v40, %v40
    %v45 = vmul.f32 %v41, %v41
    %v46 = vsel %vm42, %v44, 0.0
    %v47 = vsel %vm43, %v45, 0.0
    %48 = vst [vmem:[#allocation7] sm:$0xff] %v46
    %49 = vst [vmem:[#allocation7 + $0x8] sm:$0xff] %v47
    // Predicated region
    $region18: #{tpu_custom_call.1} parent=1 // pred_check
      _
    $region19: #{tpu_custom_call.1} parent=1 // pred_check_branch
      %51 = sbr.rel (0) target = $region21
    $region20: #{tpu_custom_call.1} parent=1 // pred_region
      %s53 = ssub.s32 256, 256
      %54 = vsyncadd [#allocation4], %s53
      %s56 = sshll.u32 [#allocation7], 4
      %s57 = int_to_ptr.vmem [resolvable:$true] %s56
      %59 = dma.vmem_to_hbm [thread:$0]  %s57, 256, %s2, [#allocation4]
    $region21: #{tpu_custom_call.1} parent=1 // pred_fallthru
      _
    // Predicated region
    $region22: #{tpu_custom_call.1} parent=1 // pred_check
      _
    $region23: #{tpu_custom_call.1} parent=1 // pred_check_branch
      %61 = sbr.rel (0) target = $region25
    $region24: #{tpu_custom_call.1} parent=1 // pred_region
      %62 = dma.done [#allocation4], 256
    $region25: #{tpu_custom_call.1} parent=1 // pred_fallthru
      _
    %63 = vsyncpa [#allocation3], 1
    %64 = vsyncpa [#allocation6], 1
    %65 = vsyncpa [#allocation4], 1

</llo_original>
